<compile_context>
chip_gen: v7x
topology: tpu7x:2x2x1
jax: 0.10.0
libtpu: 0.0.40
codegen_flags: <defaults>
</compile_context>

<pallas_src>
import functools
import math

import jax
import jax.numpy as jnp
import numpy as np
from jax.experimental import pallas as pl
from jax.experimental.pallas import tpu as pltpu


def _round_up(x, m):
    return ((x + m - 1) // m) * m


def _curricular_tile_kernel(emb_ref, ker_ref, invn_ref, label_ref, ctm_ref,
                            ftl_ref, t_ref, out_ref, origin_ref, *, s):
    """Compute one (tm, tn) tile of the (B, C) CurricularFace logits."""
    tm = out_ref.shape[0]
    tn = out_ref.shape[1]
    col_base = pl.program_id(1) * tn

    # Raw weight tile straight into the MXU; the per-column L2 normalization
    # is a precomputed f32 inv-norm applied to the (tm, tn) matmul result.
    cos_theta = jnp.dot(emb_ref[...], ker_ref[...],
                        preferred_element_type=jnp.float32)
    cos_theta = jnp.clip(cos_theta * invn_ref[...], -1.0, 1.0)

    origin_ref[...] = (cos_theta * s).astype(origin_ref.dtype)

    # one-hot of the label column: (tm, 1) subtract instead of a (tm, tn) add.
    rel_label = label_ref[...] - col_base                      # (tm, 1)
    onehot = jax.lax.broadcasted_iota(jnp.int32, (tm, tn), 1) == rel_label

    cos_theta_m = ctm_ref[...]                                 # (tm, 1)
    final_target = ftl_ref[...]                                # (tm, 1)
    new_t = t_ref[0, 0]                                        # SMEM scalar

    mask = cos_theta > cos_theta_m
    cos_upd = jnp.where(mask, cos_theta * (new_t + cos_theta), cos_theta)
    cos_upd = jnp.where(onehot, final_target, cos_upd)         # scatter_(1, label)
    out_ref[...] = (cos_upd * s).astype(out_ref.dtype)


def curricular_face(embeddings, kernel, label, t, *, margin=0.5, rescale=64.0,
                    compute_dtype=jnp.float32, out_dtype=jnp.float32):
    """Pallas implementation of CurricularFace.forward.

    Returns (output, origin_cos * s, new_t).  `compute_dtype=jnp.bfloat16`
    streams the MXU operands in bf16 (halves weight DMA bytes, f32 accumulation
    on the MXU); `out_dtype=jnp.bfloat16` halves output store traffic.
    """
    cos_m = math.cos(margin)
    sin_m = math.sin(margin)
    threshold = math.cos(math.pi - margin)
    mm = math.sin(math.pi - margin) * margin

    B, D = embeddings.shape
    D2, C = kernel.shape
    assert D == D2
    label = label.astype(jnp.int32)

    # --- O(B*D) preamble: label-row scalars + running-buffer update (f32) ---
    emb32 = embeddings.astype(jnp.float32)
    emb_n = emb32 * jax.lax.rsqrt(jnp.sum(emb32 * emb32, axis=1, keepdims=True))

    # Gather the B label columns BEFORE casting (avoids a full D*C f32 copy).
    ker_lab = kernel[:, label].astype(jnp.float32)                    # (D, B)
    ker_lab_n = ker_lab * jax.lax.rsqrt(
        jnp.sum(ker_lab * ker_lab, axis=0, keepdims=True))
    target_logit = jnp.clip(
        jnp.sum(emb_n * ker_lab_n.T, axis=1, keepdims=True), -1.0, 1.0)

    sin_theta = jnp.sqrt(1.0 - target_logit * target_logit)
    cos_theta_m = target_logit * cos_m - sin_theta * sin_m
    final_target = jnp.where(target_logit > threshold,
                             cos_theta_m, target_logit - mm)
    new_t = jnp.mean(target_logit) * 0.01 + 0.99 * jnp.asarray(t, jnp.float32)

    # Per-column inv-norm of the full weight in f32 (one fused reduce pass);
    # padded columns get sumsq == 1.0 so inv_norm stays finite.
    sumsq = jnp.sum(jnp.square(kernel.astype(jnp.float32)),
                    axis=0, keepdims=True)                            # (1, C)

    # --- tile sizes & padding (lane-dense tn, sublane-aligned tm) -----------
    tm = 256 if B >= 256 else min(128, _round_up(B, 8))
    tn = min(1024, _round_up(C, 128))
    B_pad = _round_up(B, tm)
    C_pad = _round_up(C, tn)

    emb_in = jnp.pad(emb_n, ((0, B_pad - B), (0, 0))).astype(compute_dtype)
    ker_in = kernel.astype(compute_dtype)          # direct cast, no f32 round-trip
    if C_pad != C:
        ker_in = jnp.pad(ker_in, ((0, 0), (0, C_pad - C)))
        sumsq = jnp.pad(sumsq, ((0, 0), (0, C_pad - C)), constant_values=1.0)
    inv_norm_in = jax.lax.rsqrt(sumsq)                                # (1, C_pad) f32
    label_in = jnp.pad(label.reshape(B, 1), ((0, B_pad - B), (0, 0)))
    ctm_in = jnp.pad(cos_theta_m, ((0, B_pad - B), (0, 0)))
    ftl_in = jnp.pad(final_target, ((0, B_pad - B), (0, 0)))
    t_in = new_t.reshape(1, 1)

    grid = (B_pad // tm, C_pad // tn)
    kern = functools.partial(_curricular_tile_kernel, s=float(rescale))

    comp_itemsize = jnp.dtype(compute_dtype).itemsize
    out_itemsize = jnp.dtype(out_dtype).itemsize

    # HBM bytes: emb block index is constant along j (innermost), so each emb
    # row tile is DMA'd once per i; the weight is streamed once per row tile.
    bytes_accessed = int(emb_in.size * comp_itemsize
                         + (ker_in.size * comp_itemsize
                            + inv_norm_in.size * 4) * grid[0]
                         + 2 * B_pad * C_pad * out_itemsize)

    # VMEM budget: double-buffered weight/emb/outputs + small per-row vectors.
    vmem_bytes = (2 * D * tn * comp_itemsize
                  + 2 * tm * D * comp_itemsize
                  + 2 * 2 * tm * tn * out_itemsize
                  + 2 * tn * 4
                  + 6 * tm * 4)
    vmem_limit = int(min(max(2 * vmem_bytes, 16 << 20), 64 << 20))

    out, origin = pl.pallas_call(
        kern,
        grid=grid,
        in_specs=[
            pl.BlockSpec((tm, D), lambda i, j: (i, 0)),          # emb_n
            pl.BlockSpec((D, tn), lambda i, j: (0, j)),          # raw weight tile
            pl.BlockSpec((1, tn), lambda i, j: (0, j)),          # inv_norm (f32)
            pl.BlockSpec((tm, 1), lambda i, j: (i, 0)),          # label
            pl.BlockSpec((tm, 1), lambda i, j: (i, 0)),          # cos_theta_m
            pl.BlockSpec((tm, 1), lambda i, j: (i, 0)),          # final_target
            pl.BlockSpec(memory_space=pltpu.MemorySpace.SMEM),   # new_t (1,1)
        ],
        out_specs=(
            pl.BlockSpec((tm, tn), lambda i, j: (i, j)),
            pl.BlockSpec((tm, tn), lambda i, j: (i, j)),
        ),
        out_shape=(
            jax.ShapeDtypeStruct((B_pad, C_pad), out_dtype),
            jax.ShapeDtypeStruct((B_pad, C_pad), out_dtype),
        ),
        compiler_params=pltpu.CompilerParams(
            dimension_semantics=("parallel", "parallel"),
            vmem_limit_bytes=vmem_limit),
        cost_estimate=pl.CostEstimate(
            flops=2 * B_pad * D * C_pad,
            transcendentals=0,
            bytes_accessed=bytes_accessed),
    )(emb_in, ker_in, inv_norm_in, label_in, ctm_in, ftl_in, t_in)

    return out[:B, :C], origin[:B, :C], new_t


def _reference(embeddings, kernel, label, t, *, margin=0.5, rescale=64.0):
    """Pure-JAX reference mirroring the PyTorch forward."""
    cos_m = math.cos(margin)
    sin_m = math.sin(margin)
    threshold = math.cos(math.pi - margin)
    mm = math.sin(math.pi - margin) * margin

    emb = embeddings / jnp.linalg.norm(embeddings, axis=1, keepdims=True)
    ker = kernel / jnp.linalg.norm(kernel, axis=0, keepdims=True)
    cos_theta = jnp.clip(emb @ ker, -1.0, 1.0)
    origin = cos_theta
    tl = cos_theta[jnp.arange(emb.shape[0]), label][:, None]
    sin_theta = jnp.sqrt(1.0 - tl * tl)
    ctm = tl * cos_m - sin_theta * sin_m
    mask = cos_theta > ctm
    ftl = jnp.where(tl > threshold, ctm, tl - mm)
    new_t = jnp.mean(tl) * 0.01 + 0.99 * t
    cos_upd = jnp.where(mask, cos_theta * (new_t + cos_theta), cos_theta)
    onehot = jax.nn.one_hot(label, cos_theta.shape[1], dtype=bool)
    cos_upd = jnp.where(onehot, ftl, cos_upd)
    return cos_upd * rescale, origin * rescale, new_t


if __name__ == "__main__":
    key = jax.random.PRNGKey(0)
    k_emb, k_ker, k_lab = jax.random.split(key, 3)

    B, in_features, out_features = 8, 32, 128
    margin, rescale = 0.5, 64.0

    embeddings = jax.random.normal(k_emb, (B, in_features), jnp.float32)
    # xavier_uniform_ init for kernel (in_features, out_features)
    bound = math.sqrt(6.0 / (in_features + out_features))
    kernel = jax.random.uniform(k_ker, (in_features, out_features),
                                jnp.float32, -bound, bound)
    label = jax.random.randint(k_lab, (B,), 0, out_features, jnp.int32)
    t0 = jnp.zeros((), jnp.float32)   # registered buffer 't'

    # f32 MXU path: validated tightly against the pure-JAX reference.
    out, origin, new_t = curricular_face(embeddings, kernel, label, t0,
                                         margin=margin, rescale=rescale,
                                         compute_dtype=jnp.float32,
                                         out_dtype=jnp.float32)
    jax.block_until_ready((out, origin, new_t))

    ref_out, ref_origin, ref_t = _reference(embeddings, kernel, label, t0,
                                            margin=margin, rescale=rescale)
    np.testing.assert_allclose(np.asarray(out), np.asarray(ref_out),
                               rtol=1e-4, atol=1e-3)
    np.testing.assert_allclose(np.asarray(origin), np.asarray(ref_origin),
                               rtol=1e-4, atol=1e-3)
    np.testing.assert_allclose(float(new_t), float(ref_t),
                               rtol=1e-5, atol=1e-6)

    # bf16 streaming path with bf16 outputs (production default for large C).
    # The hard-example mask compare is discontinuous, so a handful of boundary
    # elements may legitimately flip vs the f32 reference; check origin
    # loosely and the vast majority of the masked output elementwise.
    out_bf, origin_bf, _ = curricular_face(embeddings, kernel, label, t0,
                                           margin=margin, rescale=rescale,
                                           compute_dtype=jnp.bfloat16,
                                           out_dtype=jnp.bfloat16)
    jax.block_until_ready((out_bf, origin_bf))
    out_bf32 = np.asarray(out_bf.astype(jnp.float32))
    origin_bf32 = np.asarray(origin_bf.astype(jnp.float32))
    assert np.all(np.isfinite(out_bf32))
    np.testing.assert_allclose(origin_bf32, np.asarray(ref_origin),
                               rtol=5e-2, atol=1.0)
    frac_ok = float(np.mean(np.abs(out_bf32 - np.asarray(ref_out)) < 1.0))
    assert frac_ok > 0.98, f"bf16 output mismatch fraction too high: {frac_ok}"

    print("KERNEL_OK")
</pallas_src>

<mosaic_0001>
module attributes {stable_mosaic.version = 11 : i64} {
  func.func @_curricular_tile_kernel(%arg0: i32, %arg1: i32, %arg2: memref<8x32xf32, #tpu.memory_space<vmem>>, %arg3: memref<32x128xf32, #tpu.memory_space<vmem>>, %arg4: memref<1x128xf32, #tpu.memory_space<vmem>>, %arg5: memref<8x1xi32, #tpu.memory_space<vmem>>, %arg6: memref<8x1xf32, #tpu.memory_space<vmem>>, %arg7: memref<8x1xf32, #tpu.memory_space<vmem>>, %arg8: memref<1x1xf32, #tpu.memory_space<smem>>, %arg9: memref<8x128xf32, #tpu.memory_space<vmem>>, %arg10: memref<8x128xf32, #tpu.memory_space<vmem>>) attributes {dimension_semantics = [#tpu.dimension_semantics<parallel>, #tpu.dimension_semantics<parallel>], iteration_bounds = array<i64: 1, 1>, scalar_prefetch = 0 : i64, scratch_operands = 0 : i64, tpu.core_type = #tpu.core_type<tc>, window_params = [{transform_indices = @transform_0, window_bounds = array<i64: 8, 32>}, {transform_indices = @transform_1, window_bounds = array<i64: 32, 128>}, {transform_indices = @transform_2, window_bounds = array<i64: 1, 128>}, {transform_indices = @transform_3, window_bounds = array<i64: 8, 1>}, {transform_indices = @transform_4, window_bounds = array<i64: 8, 1>}, {transform_indices = @transform_5, window_bounds = array<i64: 8, 1>}, {transform_indices = @transform_6, window_bounds = array<i64: 1, 1>}, {transform_indices = @transform_7, window_bounds = array<i64: 8, 128>}, {transform_indices = @transform_8, window_bounds = array<i64: 8, 128>}]} {
    %c128_i32 = arith.constant 128 : i32
    %0 = arith.muli %arg1, %c128_i32 : i32
    %c0 = arith.constant 0 : index
    %c0_0 = arith.constant 0 : index
    %1 = vector.load %arg2[%c0, %c0_0] : memref<8x32xf32, #tpu.memory_space<vmem>>, vector<8x32xf32>
    %c0_1 = arith.constant 0 : index
    %c0_2 = arith.constant 0 : index
    %2 = vector.load %arg3[%c0_1, %c0_2] : memref<32x128xf32, #tpu.memory_space<vmem>>, vector<32x128xf32>
    %cst = arith.constant dense<0.000000e+00> : vector<8x128xf32>
    %3 = tpu.matmul %1, %2, %cst {dimension_numbers = #tpu.dot_dimension_numbers<[1], [0], [0], [1], [0, 0, 1, 1], [], []>} : vector<8x32xf32>, vector<32x128xf32>, vector<8x128xf32> -> vector<8x128xf32>
    %c0_3 = arith.constant 0 : index
    %c0_4 = arith.constant 0 : index
    %4 = vector.load %arg4[%c0_3, %c0_4] : memref<1x128xf32, #tpu.memory_space<vmem>>, vector<1x128xf32>
    %5 = vector.broadcast %4 : vector<1x128xf32> to vector<8x128xf32>
    %6 = arith.mulf %3, %5 : vector<8x128xf32>
    %cst_5 = arith.constant -1.000000e+00 : f32
    %cst_6 = arith.constant 1.000000e+00 : f32
    %7 = vector.broadcast %cst_5 : f32 to vector<8x128xf32>
    %8 = arith.maximumf %7, %6 : vector<8x128xf32>
    %9 = vector.broadcast %cst_6 : f32 to vector<8x128xf32>
    %10 = arith.minimumf %9, %8 : vector<8x128xf32>
    %cst_7 = arith.constant 6.400000e+01 : f32
    %11 = vector.broadcast %cst_7 : f32 to vector<8x128xf32>
    %12 = arith.mulf %10, %11 : vector<8x128xf32>
    %c0_8 = arith.constant 0 : index
    %c0_9 = arith.constant 0 : index
    %13 = vector.load %arg10[%c0_8, %c0_9] : memref<8x128xf32, #tpu.memory_space<vmem>>, vector<8x128xf32>
    tpu.vector_store %arg10[%c0_8, %c0_9], %12 {strides = array<i32>} : memref<8x128xf32, #tpu.memory_space<vmem>>, vector<8x128xf32>,
    %c0_10 = arith.constant 0 : index
    %c0_11 = arith.constant 0 : index
    %14 = vector.load %arg5[%c0_10, %c0_11] : memref<8x1xi32, #tpu.memory_space<vmem>>, vector<8x1xi32>
    %15 = vector.broadcast %0 : i32 to vector<8x1xi32>
    %16 = arith.subi %14, %15 : vector<8x1xi32>
    %17 = tpu.iota {dimensions = array<i32: 1>} : vector<8x128xi32>
    %18 = vector.broadcast %16 : vector<8x1xi32> to vector<8x128xi32>
    %19 = arith.cmpi eq, %17, %18 : vector<8x128xi32>
    %c0_12 = arith.constant 0 : index
    %c0_13 = arith.constant 0 : index
    %20 = vector.load %arg6[%c0_12, %c0_13] : memref<8x1xf32, #tpu.memory_space<vmem>>, vector<8x1xf32>
    %c0_14 = arith.constant 0 : index
    %c0_15 = arith.constant 0 : index
    %21 = vector.load %arg7[%c0_14, %c0_15] : memref<8x1xf32, #tpu.memory_space<vmem>>, vector<8x1xf32>
    %c0_16 = arith.constant 0 : index
    %c0_17 = arith.constant 0 : index
    %22 = memref.load %arg8[%c0_16, %c0_17] : memref<1x1xf32, #tpu.memory_space<smem>>
    %23 = vector.broadcast %20 : vector<8x1xf32> to vector<8x128xf32>
    %24 = arith.cmpf ogt, %10, %23 : vector<8x128xf32>
    %25 = vector.broadcast %22 : f32 to vector<8x128xf32>
    %26 = arith.addf %25, %10 : vector<8x128xf32>
    %27 = arith.mulf %10, %26 : vector<8x128xf32>
    %28 = arith.select %24, %27, %10 : vector<8x128xi1>, vector<8x128xf32>
    %29 = vector.shape_cast %21 : vector<8x1xf32> to vector<8x1xf32>
    %30 = vector.broadcast %29 : vector<8x1xf32> to vector<8x128xf32>
    %31 = arith.select %19, %30, %28 : vector<8x128xi1>, vector<8x128xf32>
    %cst_18 = arith.constant 6.400000e+01 : f32
    %32 = vector.broadcast %cst_18 : f32 to vector<8x128xf32>
    %33 = arith.mulf %31, %32 : vector<8x128xf32>
    %c0_19 = arith.constant 0 : index
    %c0_20 = arith.constant 0 : index
    %34 = vector.load %arg9[%c0_19, %c0_20] : memref<8x128xf32, #tpu.memory_space<vmem>>, vector<8x128xf32>
    tpu.vector_store %arg9[%c0_19, %c0_20], %33 {strides = array<i32>} : memref<8x128xf32, #tpu.memory_space<vmem>>, vector<8x128xf32>,
    return
  }
  func.func @transform_0(%arg0: i32, %arg1: i32) -> (i32, i32) {
    %c0_i32 = arith.constant 0 : i32
    %c0_i32_0 = arith.constant 0 : i32
    return %arg0, %c0_i32 : i32, i32
  }
  func.func @transform_1(%arg0: i32, %arg1: i32) -> (i32, i32) {
    %c0_i32 = arith.constant 0 : i32
    %c0_i32_0 = arith.constant 0 : i32
    return %c0_i32, %arg1 : i32, i32
  }
  func.func @transform_2(%arg0: i32, %arg1: i32) -> (i32, i32) {
    %c0_i32 = arith.constant 0 : i32
    %c0_i32_0 = arith.constant 0 : i32
    return %c0_i32, %arg1 : i32, i32
  }
  func.func @transform_3(%arg0: i32, %arg1: i32) -> (i32, i32) {
    %c0_i32 = arith.constant 0 : i32
    %c0_i32_0 = arith.constant 0 : i32
    return %arg0, %c0_i32 : i32, i32
  }
  func.func @transform_4(%arg0: i32, %arg1: i32) -> (i32, i32) {
    %c0_i32 = arith.constant 0 : i32
    %c0_i32_0 = arith.constant 0 : i32
    return %arg0, %c0_i32 : i32, i32
  }
  func.func @transform_5(%arg0: i32, %arg1: i32) -> (i32, i32) {
    %c0_i32 = arith.constant 0 : i32
    %c0_i32_0 = arith.constant 0 : i32
    return %arg0, %c0_i32 : i32, i32
  }
  func.func @transform_6(%arg0: i32, %arg1: i32) -> (i32, i32) {
    %c0_i32 = arith.constant 0 : i32
    %c0_i32_0 = arith.constant 0 : i32
    %c0_i32_1 = arith.constant 0 : i32
    return %c0_i32, %c0_i32_0 : i32, i32
  }
  func.func @transform_7(%arg0: i32, %arg1: i32) -> (i32, i32) {
    %c0_i32 = arith.constant 0 : i32
    return %arg0, %arg1 : i32, i32
  }
  func.func @transform_8(%arg0: i32, %arg1: i32) -> (i32, i32) {
    %c0_i32 = arith.constant 0 : i32
    return %arg0, %arg1 : i32, i32
  }
}

</mosaic_0001>

<llo_original>
// kernel: tpu_custom_call.1
$region0: #{tpu_custom_call.1}
  #allocation0 [shape = 'u32[]', space=smem, size = 0x4, offset = 0x4, fixed_abs, tag = 'smem constant byte address 0x4 - core index']
  #allocation1 [shape = 'u32[144,128]{1,0:T(1,128)}', space=vmem, size = 0x12000, scoped, tag = 'internal scratch']
  #allocation2 [shape = 'f32[1,1]{1,0:T(1,128)S(6)}', space=smem, size = 0x200, scoped, tag = 'scoped memory for tpu_custom_call.1']
  %s0 = inlined_call_operand.hbm [shape: f32[8,32], index: 0, kind: input, shape index: {}]
  %s1 = inlined_call_operand.vmem [shape: f32[32,128], index: 1, kind: input, shape index: {}]
  %s2 = inlined_call_operand.vmem [shape: f32[1,128], index: 2, kind: input, shape index: {}]
  %s3 = inlined_call_operand.vmem [shape: s32[8,1], index: 3, kind: input, shape index: {}]
  %s4 = inlined_call_operand.vmem [shape: f32[8,1], index: 4, kind: input, shape index: {}]
  %s5 = inlined_call_operand.vmem [shape: f32[8,1], index: 5, kind: input, shape index: {}]
  %s6 = inlined_call_operand.<no memory space> [shape: f32[1,1], index: 6, kind: input, shape index: {}]
  %s7 = inlined_call_operand.hbm [shape: f32[8,128], index: 7, kind: output, shape index: {0}]
  %s8 = inlined_call_operand.hbm [shape: f32[8,128], index: 8, kind: output, shape index: {1}]
  %9 = xla_tuple %s7, %s8
  %s10 = sld [smem:[#allocation0]]
  $region50: #{tpu_custom_call.1} parent=0
    _
  %s12 = ssub.s32 1, %s10
  %s13 = scalar_select 0, %s12, %s10
  %14 = sst [smem:[#allocation2]] %s6
  $region1: #{tpu_custom_call.1} parent=0
    #allocation3 [shape = 'u8[4096]{0}', space=vmem, size = 0x1000, scoped, tag = 'input window, operand 0, single buffered']
    #allocation4 [shape = 's32[1]{0}', space=sflag, size = 0x4, scoped, tag = 'scoped memory for tpu_custom_call.1']
    #allocation5 [shape = 's32[1]{0}', space=sflag, size = 0x4, scoped, tag = 'scoped memory for tpu_custom_call.1']
    #allocation6 [shape = 'u8[4096]{0}', space=vmem, size = 0x1000, scoped, tag = 'output window, operand 0, single buffered']
    #allocation7 [shape = 'u8[4096]{0}', space=vmem, size = 0x1000, scoped, tag = 'output window, operand 1, single buffered']
    #allocation8 [shape = 's32[1]{0}', space=sflag, size = 0x4, scoped, tag = 'scoped memory for tpu_custom_call.1']
    %15 = vsyncpa [#allocation4], 0
    %16 = vsyncpa [#allocation5], 0
    %17 = vsyncpa [#allocation8], 0
    // Predicated region
    $region2: #{tpu_custom_call.1} parent=1 // pred_check
      _
    $region3: #{tpu_custom_call.1} parent=1 // pred_check_branch
      %19 = sbr.rel (0) target = $region5
    $region4: #{tpu_custom_call.1} parent=1 // pred_region
      %s21 = ssub.s32 128, 128
      %22 = vsyncadd [#allocation4], %s21
      %s24 = sshll.u32 [#allocation3], 4
      %s25 = int_to_ptr.vmem [resolvable:$true] %s24
      %27 = dma.hbm_to_vmem [thread:$0]  %s0, 128, %s25, [#allocation4]
    $region5: #{tpu_custom_call.1} parent=1 // pred_fallthru
      _
    // Predicated region
    $region6: #{tpu_custom_call.1} parent=1 // pred_check
      _
    $region7: #{tpu_custom_call.1} parent=1 // pred_check_branch
      %29 = sbr.rel (0) target = $region9
    $region8: #{tpu_custom_call.1} parent=1 // pred_region
      _
    $region9: #{tpu_custom_call.1} parent=1 // pred_fallthru
      _
    // Predicated region
    $region10: #{tpu_custom_call.1} parent=1 // pred_check
      _
    $region11: #{tpu_custom_call.1} parent=1 // pred_check_branch
      %31 = sbr.rel (0) target = $region13
    $region12: #{tpu_custom_call.1} parent=1 // pred_region
      _
    $region13: #{tpu_custom_call.1} parent=1 // pred_fallthru
      _
    // Predicated region
    $region14: #{tpu_custom_call.1} parent=1 // pred_check
      _
    $region15: #{tpu_custom_call.1} parent=1 // pred_check_branch
      %33 = sbr.rel (0) target = $region17
    $region16: #{tpu_custom_call.1} parent=1 // pred_region
      _
    $region17: #{tpu_custom_call.1} parent=1 // pred_fallthru
      _
    // Predicated region
    $region18: #{tpu_custom_call.1} parent=1 // pred_check
      _
    $region19: #{tpu_custom_call.1} parent=1 // pred_check_branch
      %35 = sbr.rel (0) target = $region21
    $region20: #{tpu_custom_call.1} parent=1 // pred_region
      _
    $region21: #{tpu_custom_call.1} parent=1 // pred_fallthru
      _
    // Predicated region
    $region22: #{tpu_custom_call.1} parent=1 // pred_check
      _
    $region23: #{tpu_custom_call.1} parent=1 // pred_check_branch
      %37 = sbr.rel (0) target = $region25
    $region24: #{tpu_custom_call.1} parent=1 // pred_region
      _
    $region25: #{tpu_custom_call.1} parent=1 // pred_fallthru
      _
    // Predicated region
    $region26: #{tpu_custom_call.1} parent=1 // pred_check
      _
    $region27: #{tpu_custom_call.1} parent=1 // pred_check_branch
      %39 = sbr.rel (0) target = $region29
    $region28: #{tpu_custom_call.1} parent=1 // pred_region
      _
    $region29: #{tpu_custom_call.1} parent=1 // pred_fallthru
      _
    // Predicated region
    $region30: #{tpu_custom_call.1} parent=1 // pred_check
      _
    $region31: #{tpu_custom_call.1} parent=1 // pred_check_branch
      %41 = sbr.rel (0) target = $region33
    $region32: #{tpu_custom_call.1} parent=1 // pred_region
      %42 = dma.done [#allocation4], 128
    $region33: #{tpu_custom_call.1} parent=1 // pred_fallthru
      _
    %s43 = smul.u32 0, 128
    %v44 = vld [vmem:[#allocation3] sm:$0xff]
    %v45 = vld [vmem:[%s1] sm:$0xff]
    %v46 = vld [vmem:[%s1 + $0x8] sm:$0xff]
    %v47 = vld [vmem:[%s1 + $0x10] sm:$0xff]
    %v48 = vld [vmem:[%s1 + $0x18] sm:$0xff]
    %vm49 = vcmask 261120
    %v51 = vsel %vm49, %v44, 0
    %53 = vmatprep.subr.mxu0 0.0
    %54 = vmatpush1.msra.mxu0 %v45
    %55 = vmatprep.subr.mxu0 0.0
    %56 = vmatpush1.msra.mxu0 %v46
    %57 = vmatprep.subr.mxu0 0.0
    %58 = vmatpush1.msra.mxu0 %v47
    %59 = vmatprep.subr.mxu0 0.0
    %60 = vmatpush1.msra.mxu0 %v48
    %61 = vmatprep.subr.mxu0 0.0
    %62 = vmatpush1.msra.mxu0 0.0
    %63 = vmatprep.subr.mxu0 0.0
    %64 = vmatpush1.msra.mxu0 0.0
    %65 = vmatprep.subr.mxu0 0.0
    %66 = vmatpush1.msra.mxu0 0.0
    %67 = vmatprep.subr.mxu0 0.0
    %68 = vmatpush1.msra.mxu0 0.0
    %69 = vmatprep.subr.mxu0 0.0
    %70 = vmatpush1.msra.mxu0 0.0
    %71 = vmatprep.subr.mxu0 0.0
    %72 = vmatpush1.msra.mxu0 0.0
    %73 = vmatprep.subr.mxu0 0.0
    %74 = vmatpush1.msra.mxu0 0.0
    %75 = vmatprep.subr.mxu0 0.0
    %76 = vmatpush1.msra.mxu0 0.0
    %77 = vmatprep.subr.mxu0 0.0
    %78 = vmatpush1.msra.mxu0 0.0
    %79 = vmatprep.subr.mxu0 0.0
    %80 = vmatpush1.msra.mxu0 0.0
    %81 = vmatprep.subr.mxu0 0.0
    %82 = vmatpush1.msra.mxu0 0.0
    %83 = vmatprep.subr.mxu0 0.0
    %84 = vmatpush1.msra.mxu0 0.0
    %85 = vmatprep.subr.mxu0 0.0
    %86 = vmatpush1.msra.mxu0 0.0
    %87 = vmatprep.subr.mxu0 0.0
    %88 = vmatpush1.msra.mxu0 0.0
    %89 = vmatprep.subr.mxu0 0.0
    %90 = vmatpush1.msra.mxu0 0.0
    %91 = vmatprep.subr.mxu0 0.0
    %92 = vmatpush1.msra.mxu0 0.0
    %93 = vmatprep.subr.mxu0 0.0
    %94 = vmatpush1.msra.mxu0 0.0
    %95 = vmatprep.subr.mxu0 0.0
    %96 = vmatpush1.msra.mxu0 0.0
    %97 = vmatprep.subr.mxu0 0.0
    %98 = vmatpush1.msra.mxu0 0.0
    %99 = vmatprep.subr.mxu0 0.0
    %100 = vmatpush1.msra.mxu0 0.0
    %101 = vmatprep.subr.mxu0 0.0
    %102 = vmatpush1.msra.mxu0 0.0
    %103 = vmatprep.subr.mxu0 0.0
    %104 = vmatpush1.msra.mxu0 0.0
    %105 = vmatprep.subr.mxu0 0.0
    %106 = vmatpush1.msra.mxu0 0.0
    %107 = vmatprep.subr.mxu0 0.0
    %108 = vmatpush1.msra.mxu0 0.0
    %109 = vmatprep.subr.mxu0 0.0
    %110 = vmatpush1.msra.mxu0 0.0
    %111 = vmatprep.subr.mxu0 0.0
    %112 = vmatpush1.msra.mxu0 0.0
    %113 = vmatprep.subr.mxu0 0.0
    %114 = vmatpush1.msra.mxu0 0.0
    %115 = vmatprep.subr.mxu0 0.0
    %116 = vmatpush1.msra.mxu0 0.0
    %117 = vmatprep.mubr.f32.mxu0 0.0
    %118 = vmatmul.mubr.f32.gmra.mrb[0].mxu0 %v51
    %v119 = vpop.f32.mrb[0].mxu0
    %v120 = vadd.f32 0.0, %v119
    %v121 = vpop.f32.mrb[0].mxu0
    %122 = vdwg.mxu0
    %v123 = vld [vmem:[%s2] sm:$0x1]
    %v125 = vlaneseq
    %v126 = vshrl.u32 %v125, 7
    %v127 = vsub.s32 0, %v126
    %v128 = vrot.slane %v123, %v127
    %v130 = vmul.f32 %v120, %v128
    %v131 = vmax.f32 %v130, -1.0
    %v132 = vmin.f32 %v131, 1.0
    %v133 = vmul.f32 %v132, 64.0
    %134 = vst [vmem:[#allocation7] sm:$0xff] %v133
    %v135 = vld [vmem:[%s3] sm:$0xff]
    %v136 = vstv %s43
    %v137 = vsub.s32 %v135, %v136
    %v138 = vlaneseq
    %v139 = vand.u32 %v138, 127
    %140 = vset.pattern.permute.xlu0 0
    %141 = vperm.xlu0 %140, %v137
    %v142 = vpop.permute.xlu0 %141
    %vm143 = vcmp.eq.s32.totalorder %v139, %v142
    %v144 = vld [vmem:[%s4] sm:$0xff]
    %v145 = vld [vmem:[%s5] sm:$0xff]
    %s146 = sld [smem:[#allocation2]]
    %148 = vset.pattern.permute.xlu0 0
    %149 = vperm.xlu0 %148, %v144
    %v150 = vpop.permute.xlu0 %149
    %vm152 = vcmp.gt.f32.partialorder %v132, %v150
    %v153 = vstv %s146
    %v154 = vadd.f32 %v153, %v132
    %v155 = vmul.f32 %v132, %v154
    %v156 = vsel %vm152, %v155, %v132
    %158 = vset.pattern.permute.xlu0 0
    %159 = vperm.xlu0 %158, %v145
    %v160 = vpop.permute.xlu0 %159
    %v162 = vsel %vm143, %v160, %v156
    %v163 = vmul.f32 %v162, 64.0
    %164 = vst [vmem:[#allocation6] sm:$0xff] %v163
    // Predicated region
    $region34: #{tpu_custom_call.1} parent=1 // pred_check
      _
    $region35: #{tpu_custom_call.1} parent=1 // pred_check_branch
      %166 = sbr.rel (0) target = $region37
    $region36: #{tpu_custom_call.1} parent=1 // pred_region
      %s168 = ssub.s32 128, 128
      %169 = vsyncadd [#allocation5], %s168
      %s171 = sshll.u32 [#allocation6], 4
      %s172 = int_to_ptr.vmem [resolvable:$true] %s171
      %174 = dma.vmem_to_hbm [thread:$0]  %s172, 128, %s7, [#allocation5]
    $region37: #{tpu_custom_call.1} parent=1 // pred_fallthru
      _
    // Predicated region
    $region38: #{tpu_custom_call.1} parent=1 // pred_check
      _
    $region39: #{tpu_custom_call.1} parent=1 // pred_check_branch
      %176 = sbr.rel (0) target = $region41
    $region40: #{tpu_custom_call.1} parent=1 // pred_region
      %s178 = ssub.s32 128, 128
      %179 = vsyncadd [#allocation8], %s178
      %s181 = sshll.u32 [#allocation7], 4
      %s182 = int_to_ptr.vmem [resolvable:$true] %s181
      %184 = dma.vmem_to_hbm [thread:$0]  %s182, 128, %s8, [#allocation8]
    $region41: #{tpu_custom_call.1} parent=1 // pred_fallthru
      _
    // Predicated region
    $region42: #{tpu_custom_call.1} parent=1 // pred_check
      _
    $region43: #{tpu_custom_call.1} parent=1 // pred_check_branch
      %186 = sbr.rel (0) target = $region45
    $region44: #{tpu_custom_call.1} parent=1 // pred_region
      %187 = dma.done [#allocation5], 128
    $region45: #{tpu_custom_call.1} parent=1 // pred_fallthru
      _
    // Predicated region
    $region46: #{tpu_custom_call.1} parent=1 // pred_check
      _
    $region47: #{tpu_custom_call.1} parent=1 // pred_check_branch
      %189 = sbr.rel (0) target = $region49
    $region48: #{tpu_custom_call.1} parent=1 // pred_region
      %190 = dma.done [#allocation8], 128
    $region49: #{tpu_custom_call.1} parent=1 // pred_fallthru
      _
    %191 = vsyncpa [#allocation4], 1
    %192 = vsyncpa [#allocation5], 1
    %193 = vsyncpa [#allocation8], 1

</llo_original>
